<compile_context>
chip_gen: v6e
topology: v6e:2x2x1
jax: 0.10.0
libtpu: 0.0.40
codegen_flags: <defaults>
</compile_context>

<pallas_src>
import functools

import jax
import jax.numpy as jnp
from jax.experimental import pallas as pl
from jax.experimental.pallas import tpu as pltpu


def _upconv_kernel(x_ref, w_ref, b_ref, o_ref, *, use_mxu):
    """relu(x) @ W2 + b, then the final relu (from relu(cat([f, .], dim=1)))."""
    xr = jnp.maximum(x_ref[...], 0.0)
    if use_mxu:
        y = jnp.dot(xr, w_ref[...], preferred_element_type=jnp.float32)
    else:
        # Tiny C_in: pure VPU broadcast-FMA over input channels (skip MXU
        # push/pop latency; this is HBM-bound layout work anyway).
        xr = xr.astype(jnp.float32)
        w = w_ref[...].astype(jnp.float32)
        y = xr[:, 0:1] * w[0:1, :]
        for c in range(1, w.shape[0]):
            y = y + xr[:, c:c + 1] * w[c:c + 1, :]
    y = y + b_ref[...].astype(jnp.float32)
    o_ref[...] = jnp.maximum(y, 0.0).astype(o_ref.dtype)


def _choose_tm(M, cols_in, cols_out, itemsize, budget_bytes):
    """Largest power-of-two row tile whose double-buffered tiles fit budget."""
    per_row = 2 * (cols_in + cols_out) * itemsize   # double-buffered x + out
    tm = 1024
    while tm > 8 and tm * per_row > budget_bytes:
        tm //= 2
    return max(1, min(tm, M))


def up_pool(x_nchw, f_nchw, weight, bias, *, tm=None, compute_dtype=None,
            vmem_budget_bytes=12 * 1024 * 1024):
    """UpPool forward.

    x_nchw: (N, C_in, H, W)      input from previous (deeper) layer
    f_nchw: (N, C_f, 2H, 2W)     skip features from the down pass
    weight: (C_in, C_out, 2, 2)  ConvTranspose2d weight (PyTorch layout)
    bias:   (C_out,)
    returns (N, C_f + C_out, 2H, 2W) == relu(cat([f, upconv(relu(x))], dim=1))
    """
    N, C_in, H, W = x_nchw.shape
    C_out = weight.shape[1]
    Nf, C_f, H2, W2 = f_nchw.shape
    assert Nf == N and H2 == 2 * H and W2 == 2 * W

    out_dtype = x_nchw.dtype
    cd = compute_dtype if compute_dtype is not None else x_nchw.dtype

    # ---- layout prep (plain JAX; x is the smallest tensor involved) ----
    # x: NCHW -> (N*H*W, C_in) rows of per-pixel channel vectors.
    x2 = jnp.transpose(x_nchw, (0, 2, 3, 1)).reshape(N * H * W, C_in).astype(cd)
    # weight: (C_in, C_out, kh, kw) -> (C_in, kh, kw, C_out) -> (C_in, 4*C_out)
    # so kernel output columns are ordered (dh, dw, o).
    w2 = jnp.transpose(weight, (0, 2, 3, 1)).reshape(C_in, 4 * C_out).astype(cd)
    b2 = jnp.tile(bias.astype(jnp.float32), 4).reshape(1, 4 * C_out)

    M = N * H * W
    cols_out = 4 * C_out
    itemsize = jnp.dtype(cd).itemsize
    if tm is None:
        tm = _choose_tm(M, C_in, cols_out, itemsize, vmem_budget_bytes)
    grid_m = -(-M // tm)                 # ceil-div grid, no divisibility assert
    Mp = grid_m * tm
    if Mp != M:
        x2 = jnp.pad(x2, ((0, Mp - M), (0, 0)))   # padded rows sliced off below

    # Weight/bias have constant index_maps -> fetched once and kept resident.
    # NOTE: on v7x (64 MiB VMEM) a very large weight could additionally use
    # pipeline_mode=pl.Buffered(1) on w2/b2 to avoid double-buffering it.
    est_vmem = (2 * tm * (C_in + cols_out) + 2 * (C_in + 1) * cols_out) * itemsize
    vmem_limit = int(min(48 * 1024 * 1024, max(2 * est_vmem, 32 * 1024 * 1024)))

    y = pl.pallas_call(
        functools.partial(_upconv_kernel, use_mxu=(C_in >= 16)),
        out_shape=jax.ShapeDtypeStruct((Mp, cols_out), out_dtype),
        grid_spec=pltpu.PrefetchScalarGridSpec(
            num_scalar_prefetch=0,
            grid=(grid_m,),
            in_specs=[
                pl.BlockSpec((tm, C_in), lambda i: (i, 0)),
                pl.BlockSpec((C_in, cols_out), lambda i: (0, 0)),
                pl.BlockSpec((1, cols_out), lambda i: (0, 0)),
            ],
            out_specs=pl.BlockSpec((tm, cols_out), lambda i: (i, 0)),
        ),
        compiler_params=pltpu.CompilerParams(
            dimension_semantics=("parallel",),
            vmem_limit_bytes=vmem_limit),
    )(x2, w2, b2)

    # (Mp, 4*C_out) -> drop padded rows -> (N, H, W, dh, dw, C_out); this
    # reshape is row-major and free (no data movement).
    up = y[:M].reshape(N, H, W, 2, 2, C_out)
    # Single fused XLA pass: scatter upconv output into NCHW, relu(f), concat.
    up_nchw = jnp.transpose(up, (0, 5, 1, 3, 2, 4)).reshape(N, C_out, H2, W2)
    return jnp.concatenate(
        [jnp.maximum(f_nchw, 0.0), up_nchw.astype(out_dtype)], axis=1)


def _reference(x_nchw, f_nchw, weight, bias):
    """Pure-JAX reference matching PyTorch semantics."""
    N, C_in, H, W = x_nchw.shape
    C_out = weight.shape[1]
    xr = jnp.maximum(x_nchw, 0.0)
    # out[n, o, 2h+d, 2w+k] = sum_c xr[n,c,h,w] * weight[c,o,d,k] + bias[o]
    y = jnp.einsum("nchw,codk->nohdwk", xr, weight)
    y = y.reshape(N, C_out, 2 * H, 2 * W) + bias[None, :, None, None]
    return jnp.maximum(jnp.concatenate([f_nchw, y], axis=1), 0.0)


if __name__ == "__main__":
    key = jax.random.PRNGKey(0)
    k_x, k_f, k_w, k_b = jax.random.split(key, 4)

    in_channel = 4
    out_channel = in_channel // 2
    N, H, W = 2, 8, 8

    # inputs (PyTorch NCHW convention)
    x = jax.random.normal(k_x, (N, in_channel, H, W), dtype=jnp.float32)
    f = jax.random.normal(k_f, (N, out_channel, 2 * H, 2 * W), dtype=jnp.float32)

    # deterministic synthetic parameters (ConvTranspose2d shapes)
    weight = 0.1 * jax.random.normal(
        k_w, (in_channel, out_channel, 2, 2), dtype=jnp.float32)
    bias = 0.05 * jax.random.normal(k_b, (out_channel,), dtype=jnp.float32)

    out = jax.block_until_ready(jax.jit(up_pool)(x, f, weight, bias))
    ref = _reference(x, f, weight, bias)

    assert out.shape == (N, out_channel + out_channel, 2 * H, 2 * W)
    assert jnp.allclose(out, ref, atol=1e-5, rtol=1e-5)
    print("KERNEL_OK")
</pallas_src>

<mosaic_0001>
module attributes {stable_mosaic.version = 11 : i64} {
  func.func @_upconv_kernel(%arg0: i32, %arg1: memref<128x4xf32, #tpu.memory_space<vmem>>, %arg2: memref<4x8xf32, #tpu.memory_space<vmem>>, %arg3: memref<1x8xf32, #tpu.memory_space<vmem>>, %arg4: memref<128x8xf32, #tpu.memory_space<vmem>>) attributes {dimension_semantics = [#tpu.dimension_semantics<parallel>], iteration_bounds = array<i64: 1>, scalar_prefetch = 0 : i64, scratch_operands = 0 : i64, tpu.core_type = #tpu.core_type<tc>, window_params = [{transform_indices = @transform_0, window_bounds = array<i64: 128, 4>}, {pipeline_mode = #tpu.pipeline_mode<synchronous>, transform_indices = @transform_1, window_bounds = array<i64: 4, 8>}, {pipeline_mode = #tpu.pipeline_mode<synchronous>, transform_indices = @transform_2, window_bounds = array<i64: 1, 8>}, {transform_indices = @transform_3, window_bounds = array<i64: 128, 8>}]} {
    %c0 = arith.constant 0 : index
    %c0_0 = arith.constant 0 : index
    %0 = vector.load %arg1[%c0, %c0_0] : memref<128x4xf32, #tpu.memory_space<vmem>>, vector<128x4xf32>
    %cst = arith.constant 0.000000e+00 : f32
    %1 = vector.broadcast %cst : f32 to vector<128x4xf32>
    %2 = arith.maximumf %0, %1 : vector<128x4xf32>
    %c0_1 = arith.constant 0 : index
    %c0_2 = arith.constant 0 : index
    %3 = vector.load %arg2[%c0_1, %c0_2] : memref<4x8xf32, #tpu.memory_space<vmem>>, vector<4x8xf32>
    %4 = vector.extract_strided_slice %2 {offsets = [0, 0], sizes = [128, 1], strides = [1, 1]} : vector<128x4xf32> to vector<128x1xf32>
    %5 = vector.extract_strided_slice %3 {offsets = [0, 0], sizes = [1, 8], strides = [1, 1]} : vector<4x8xf32> to vector<1x8xf32>
    %6 = vector.broadcast %4 : vector<128x1xf32> to vector<128x8xf32>
    %7 = vector.broadcast %5 : vector<1x8xf32> to vector<128x8xf32>
    %8 = arith.mulf %6, %7 : vector<128x8xf32>
    %9 = vector.extract_strided_slice %2 {offsets = [0, 1], sizes = [128, 1], strides = [1, 1]} : vector<128x4xf32> to vector<128x1xf32>
    %10 = vector.extract_strided_slice %3 {offsets = [1, 0], sizes = [1, 8], strides = [1, 1]} : vector<4x8xf32> to vector<1x8xf32>
    %11 = vector.broadcast %9 : vector<128x1xf32> to vector<128x8xf32>
    %12 = vector.broadcast %10 : vector<1x8xf32> to vector<128x8xf32>
    %13 = arith.mulf %11, %12 : vector<128x8xf32>
    %14 = arith.addf %8, %13 : vector<128x8xf32>
    %15 = vector.extract_strided_slice %2 {offsets = [0, 2], sizes = [128, 1], strides = [1, 1]} : vector<128x4xf32> to vector<128x1xf32>
    %16 = vector.extract_strided_slice %3 {offsets = [2, 0], sizes = [1, 8], strides = [1, 1]} : vector<4x8xf32> to vector<1x8xf32>
    %17 = vector.broadcast %15 : vector<128x1xf32> to vector<128x8xf32>
    %18 = vector.broadcast %16 : vector<1x8xf32> to vector<128x8xf32>
    %19 = arith.mulf %17, %18 : vector<128x8xf32>
    %20 = arith.addf %14, %19 : vector<128x8xf32>
    %21 = vector.extract_strided_slice %2 {offsets = [0, 3], sizes = [128, 1], strides = [1, 1]} : vector<128x4xf32> to vector<128x1xf32>
    %22 = vector.extract_strided_slice %3 {offsets = [3, 0], sizes = [1, 8], strides = [1, 1]} : vector<4x8xf32> to vector<1x8xf32>
    %23 = vector.broadcast %21 : vector<128x1xf32> to vector<128x8xf32>
    %24 = vector.broadcast %22 : vector<1x8xf32> to vector<128x8xf32>
    %25 = arith.mulf %23, %24 : vector<128x8xf32>
    %26 = arith.addf %20, %25 : vector<128x8xf32>
    %c0_3 = arith.constant 0 : index
    %c0_4 = arith.constant 0 : index
    %27 = vector.load %arg3[%c0_3, %c0_4] : memref<1x8xf32, #tpu.memory_space<vmem>>, vector<1x8xf32>
    %28 = vector.broadcast %27 : vector<1x8xf32> to vector<128x8xf32>
    %29 = arith.addf %26, %28 : vector<128x8xf32>
    %cst_5 = arith.constant 0.000000e+00 : f32
    %30 = vector.broadcast %cst_5 : f32 to vector<128x8xf32>
    %31 = arith.maximumf %29, %30 : vector<128x8xf32>
    %c0_6 = arith.constant 0 : index
    %c0_7 = arith.constant 0 : index
    %32 = vector.load %arg4[%c0_6, %c0_7] : memref<128x8xf32, #tpu.memory_space<vmem>>, vector<128x8xf32>
    tpu.vector_store %arg4[%c0_6, %c0_7], %31 {strides = array<i32>} : memref<128x8xf32, #tpu.memory_space<vmem>>, vector<128x8xf32>,
    return
  }
  func.func @transform_0(%arg0: i32) -> (i32, i32) {
    %c0_i32 = arith.constant 0 : i32
    %c0_i32_0 = arith.constant 0 : i32
    return %arg0, %c0_i32 : i32, i32
  }
  func.func @transform_1(%arg0: i32) -> (i32, i32) {
    %c0_i32 = arith.constant 0 : i32
    %c0_i32_0 = arith.constant 0 : i32
    %c0_i32_1 = arith.constant 0 : i32
    return %c0_i32, %c0_i32_0 : i32, i32
  }
  func.func @transform_2(%arg0: i32) -> (i32, i32) {
    %c0_i32 = arith.constant 0 : i32
    %c0_i32_0 = arith.constant 0 : i32
    %c0_i32_1 = arith.constant 0 : i32
    return %c0_i32, %c0_i32_0 : i32, i32
  }
  func.func @transform_3(%arg0: i32) -> (i32, i32) {
    %c0_i32 = arith.constant 0 : i32
    %c0_i32_0 = arith.constant 0 : i32
    return %arg0, %c0_i32 : i32, i32
  }
}

</mosaic_0001>

<llo_original>
// kernel: tile.8
$region0: #{tile.8}
  #allocation0 [shape = 's32[1]{0}', space=sflag, size = 0x4, scoped, tag = 'scoped memory for tile.8']
  %s0 = inlined_call_operand.vmem [shape: f32[2], index: 0, kind: input, shape index: {}]
  %s1 = inlined_call_operand.vmem [shape: f32[4,2], index: 1, kind: output, shape index: {}]
  // Predicated region
  $region2: #{tile.8} parent=0 // pred_check
    _
  $region3: #{tile.8} parent=0 // pred_check_branch
    %3 = sbr.rel (0) target = $region5
  $region4: #{tile.8} parent=0 // pred_region
    _
  $region5: #{tile.8} parent=0 // pred_fallthru
    _
  %v4 = vld [vmem:[%s0] ss:$0 sm:$0xff]
  %5 = vst [vmem:[%s1] sm:$0xf] %v4

// kernel: tile.9
$region0: #{tile.9}
  %s0 = inlined_call_operand.vmem [shape: f32[4,2], index: 0, kind: input, shape index: {}]
  %s1 = inlined_call_operand.vmem [shape: f32[1,8], index: 1, kind: output, shape index: {}]
  $region1: #{tile.9} parent=0
    #allocation0 [shape = 'u8[4096]{0}', space=vmem, size = 0x1000, scoped, tag = 'scoped mem for output reshape']
    #allocation1 [shape = 'u8[4096]{0}', space=vmem, size = 0x1000, scoped, tag = 'scoped mem for input reshape']
    %s3 = sshll.u32 1, 4
    %s4 = ssub.s32 %s3, 1
    %v5 = vld [vmem:[%s0] sm:%s4]
    %6 = vst [vmem:[#allocation1] sm:%s4] %v5
    %v7 = vld [vmem:[#allocation1] sm:$0x1]
    %vm8 = vcmask 15360
    %9 = vst.msk [vmem:[#allocation0] sm:$0x1] %vm8, %v7
    %s10 = scalar_lea.vmem [#allocation1], 3
    %v11 = vld [vmem:[%s10] sm:$0x1]
    %12 = vrot.lane.b32.xlu0 %v11, 6
    %v13 = vpop.permute.xlu0 %12
    %vm14 = vcmask 64560
    %15 = vst.msk [vmem:[#allocation0] sm:$0x1] %vm14, %v13
    %s16 = scalar_lea.vmem [#allocation1], 2
    %v17 = vld [vmem:[%s16] sm:$0x1]
    %18 = vrot.lane.b32.xlu0 %v17, 4
    %v19 = vpop.permute.xlu0 %18
    %vm20 = vcmask 48160
    %21 = vst.msk [vmem:[#allocation0] sm:$0x1] %vm20, %v19
    %s22 = scalar_lea.vmem [#allocation1], 1
    %v23 = vld [vmem:[%s22] sm:$0x1]
    %24 = vrot.lane.b32.xlu0 %v23, 2
    %v25 = vpop.permute.xlu0 %24
    %vm26 = vcmask 31760
    %27 = vst.msk [vmem:[#allocation0] sm:$0x1] %vm26, %v25
    %s29 = sshll.u32 1, 1
    %s30 = ssub.s32 %s29, 1
    %v32 = vld [vmem:[#allocation0] sm:%s30]
    %s33 = sshll.u32 1, 1
    %s34 = ssub.s32 %s33, 1
    %35 = vst [vmem:[%s1] sm:%s34] %v32

// kernel: up_pool.1
$region0: #{up_pool.1}
  #allocation0 [shape = 'u32[]', space=smem, size = 0x4, offset = 0x4, fixed_abs, tag = 'smem constant byte address 0x4 - core index']
  #allocation1 [shape = 'u32[144,128]{1,0:T(1,128)}', space=vmem, size = 0x12000, scoped, tag = 'internal scratch']
  %s0 = inlined_call_operand.vmem [shape: f32[128,4], index: 0, kind: input, shape index: {}]
  %s1 = inlined_call_operand.vmem [shape: f32[4,8], index: 1, kind: input, shape index: {}]
  %s2 = inlined_call_operand.vmem [shape: f32[1,8], index: 2, kind: input, shape index: {}]
  %s3 = inlined_call_operand.vmem [shape: f32[128,8], index: 3, kind: output, shape index: {}]
  %s4 = sld [smem:[#allocation0]]
  $region22: #{up_pool.1} parent=0
    _
  %s6 = ssub.s32 1, %s4
  %s7 = scalar_select 0, %s6, %s4
  // Predicated region
  $region2: #{up_pool.1} parent=0 // pred_check
    _
  $region3: #{up_pool.1} parent=0 // pred_check_branch
    %9 = sbr.rel (0) target = $region5
  $region4: #{up_pool.1} parent=0 // pred_region
    _
  $region5: #{up_pool.1} parent=0 // pred_fallthru
    _
  // Predicated region
  $region6: #{up_pool.1} parent=0 // pred_check
    _
  $region7: #{up_pool.1} parent=0 // pred_check_branch
    %11 = sbr.rel (0) target = $region9
  $region8: #{up_pool.1} parent=0 // pred_region
    _
  $region9: #{up_pool.1} parent=0 // pred_fallthru
    _
  // Predicated region
  $region10: #{up_pool.1} parent=0 // pred_check
    _
  $region11: #{up_pool.1} parent=0 // pred_check_branch
    %13 = sbr.rel (0) target = $region13
  $region12: #{up_pool.1} parent=0 // pred_region
    _
  $region13: #{up_pool.1} parent=0 // pred_fallthru
    _
  %v14 = vld [vmem:[%s0] sm:$0xff]
  %v15 = vld [vmem:[%s0 + $0x8] sm:$0xff]
  %v16 = vld [vmem:[%s0 + $0x10] sm:$0xff]
  %v17 = vld [vmem:[%s0 + $0x18] sm:$0xff]
  %v18 = vld [vmem:[%s0 + $0x20] sm:$0xff]
  %v19 = vld [vmem:[%s0 + $0x28] sm:$0xff]
  %v20 = vld [vmem:[%s0 + $0x30] sm:$0xff]
  %v21 = vld [vmem:[%s0 + $0x38] sm:$0xff]
  %v22 = vld [vmem:[%s0 + $0x40] sm:$0xff]
  %v23 = vld [vmem:[%s0 + $0x48] sm:$0xff]
  %v24 = vld [vmem:[%s0 + $0x50] sm:$0xff]
  %v25 = vld [vmem:[%s0 + $0x58] sm:$0xff]
  %v26 = vld [vmem:[%s0 + $0x60] sm:$0xff]
  %v27 = vld [vmem:[%s0 + $0x68] sm:$0xff]
  %v28 = vld [vmem:[%s0 + $0x70] sm:$0xff]
  %v29 = vld [vmem:[%s0 + $0x78] sm:$0xff]
  %v30 = vmax.f32 %v14, 0.0
  %v31 = vmax.f32 %v15, 0.0
  %v32 = vmax.f32 %v16, 0.0
  %v33 = vmax.f32 %v17, 0.0
  %v34 = vmax.f32 %v18, 0.0
  %v35 = vmax.f32 %v19, 0.0
  %v36 = vmax.f32 %v20, 0.0
  %v37 = vmax.f32 %v21, 0.0
  %v38 = vmax.f32 %v22, 0.0
  %v39 = vmax.f32 %v23, 0.0
  %v40 = vmax.f32 %v24, 0.0
  %v41 = vmax.f32 %v25, 0.0
  %v42 = vmax.f32 %v26, 0.0
  %v43 = vmax.f32 %v27, 0.0
  %v44 = vmax.f32 %v28, 0.0
  %v45 = vmax.f32 %v29, 0.0
  %v46 = vld [vmem:[%s1] sm:$0xf]
  %48 = vset.pattern.permute.xlu0 0
  %49 = vperm.xlu0 %48, %v30
  %v50 = vpop.permute.xlu0 %49
  %53 = vset.pattern.permute.xlu0 0
  %54 = vperm.xlu0 %53, %v31
  %v55 = vpop.permute.xlu0 %54
  %58 = vset.pattern.permute.xlu0 0
  %59 = vperm.xlu0 %58, %v32
  %v60 = vpop.permute.xlu0 %59
  %63 = vset.pattern.permute.xlu0 0
  %64 = vperm.xlu0 %63, %v33
  %v65 = vpop.permute.xlu0 %64
  %68 = vset.pattern.permute.xlu0 0
  %69 = vperm.xlu0 %68, %v34
  %v70 = vpop.permute.xlu0 %69
  %73 = vset.pattern.permute.xlu0 0
  %74 = vperm.xlu0 %73, %v35
  %v75 = vpop.permute.xlu0 %74
  %78 = vset.pattern.permute.xlu0 0
  %79 = vperm.xlu0 %78, %v36
  %v80 = vpop.permute.xlu0 %79
  %83 = vset.pattern.permute.xlu0 0
  %84 = vperm.xlu0 %83, %v37
  %v85 = vpop.permute.xlu0 %84
  %88 = vset.pattern.permute.xlu0 0
  %89 = vperm.xlu0 %88, %v38
  %v90 = vpop.permute.xlu0 %89
  %93 = vset.pattern.permute.xlu0 0
  %94 = vperm.xlu0 %93, %v39
  %v95 = vpop.permute.xlu0 %94
  %98 = vset.pattern.permute.xlu0 0
  %99 = vperm.xlu0 %98, %v40
  %v100 = vpop.permute.xlu0 %99
  %103 = vset.pattern.permute.xlu0 0
  %104 = vperm.xlu0 %103, %v41
  %v105 = vpop.permute.xlu0 %104
  %108 = vset.pattern.permute.xlu0 0
  %109 = vperm.xlu0 %108, %v42
  %v110 = vpop.permute.xlu0 %109
  %113 = vset.pattern.permute.xlu0 0
  %114 = vperm.xlu0 %113, %v43
  %v115 = vpop.permute.xlu0 %114
  %118 = vset.pattern.permute.xlu0 0
  %119 = vperm.xlu0 %118, %v44
  %v120 = vpop.permute.xlu0 %119
  %123 = vset.pattern.permute.xlu0 0
  %124 = vperm.xlu0 %123, %v45
  %v125 = vpop.permute.xlu0 %124
  %v127 = vlaneseq
  %v128 = vshrl.u32 %v127, 7
  %v129 = vsub.s32 0, %v128
  %v130 = vrot.slane %v46, %v129
  %v131 = vmul.f32 %v50, %v130
  %v132 = vmul.f32 %v55, %v130
  %v133 = vmul.f32 %v60, %v130
  %v134 = vmul.f32 %v65, %v130
  %v135 = vmul.f32 %v70, %v130
  %v136 = vmul.f32 %v75, %v130
  %v137 = vmul.f32 %v80, %v130
  %v138 = vmul.f32 %v85, %v130
  %v139 = vmul.f32 %v90, %v130
  %v140 = vmul.f32 %v95, %v130
  %v141 = vmul.f32 %v100, %v130
  %v142 = vmul.f32 %v105, %v130
  %v143 = vmul.f32 %v110, %v130
  %v144 = vmul.f32 %v115, %v130
  %v145 = vmul.f32 %v120, %v130
  %v146 = vmul.f32 %v125, %v130
  %147 = vset.pattern.permute.xlu0 1
  %148 = vperm.xlu0 %147, %v30
  %v149 = vpop.permute.xlu0 %148
  %151 = vset.pattern.permute.xlu0 1
  %152 = vperm.xlu0 %151, %v31
  %v153 = vpop.permute.xlu0 %152
  %155 = vset.pattern.permute.xlu0 1
  %156 = vperm.xlu0 %155, %v32
  %v157 = vpop.permute.xlu0 %156
  %159 = vset.pattern.permute.xlu0 1
  %160 = vperm.xlu0 %159, %v33
  %v161 = vpop.permute.xlu0 %160
  %163 = vset.pattern.permute.xlu0 1
  %164 = vperm.xlu0 %163, %v34
  %v165 = vpop.permute.xlu0 %164
  %167 = vset.pattern.permute.xlu0 1
  %168 = vperm.xlu0 %167, %v35
  %v169 = vpop.permute.xlu0 %168
  %171 = vset.pattern.permute.xlu0 1
  %172 = vperm.xlu0 %171, %v36
  %v173 = vpop.permute.xlu0 %172
  %175 = vset.pattern.permute.xlu0 1
  %176 = vperm.xlu0 %175, %v37
  %v177 = vpop.permute.xlu0 %176
  %179 = vset.pattern.permute.xlu0 1
  %180 = vperm.xlu0 %179, %v38
  %v181 = vpop.permute.xlu0 %180
  %183 = vset.pattern.permute.xlu0 1
  %184 = vperm.xlu0 %183, %v39
  %v185 = vpop.permute.xlu0 %184
  %187 = vset.pattern.permute.xlu0 1
  %188 = vperm.xlu0 %187, %v40
  %v189 = vpop.permute.xlu0 %188
  %191 = vset.pattern.permute.xlu0 1
  %192 = vperm.xlu0 %191, %v41
  %v193 = vpop.permute.xlu0 %192
  %195 = vset.pattern.permute.xlu0 1
  %196 = vperm.xlu0 %195, %v42
  %v197 = vpop.permute.xlu0 %196
  %199 = vset.pattern.permute.xlu0 1
  %200 = vperm.xlu0 %199, %v43
  %v201 = vpop.permute.xlu0 %200
  %203 = vset.pattern.permute.xlu0 1
  %204 = vperm.xlu0 %203, %v44
  %v205 = vpop.permute.xlu0 %204
  %207 = vset.pattern.permute.xlu0 1
  %208 = vperm.xlu0 %207, %v45
  %v209 = vpop.permute.xlu0 %208
  %v211 = vlaneseq
  %v212 = vshrl.u32 %v211, 7
  %v213 = vsub.s32 1, %v212
  %v214 = vrot.slane %v46, %v213
  %v215 = vmul.f32 %v149, %v214
  %v216 = vmul.f32 %v153, %v214
  %v217 = vmul.f32 %v157, %v214
  %v218 = vmul.f32 %v161, %v214
  %v219 = vmul.f32 %v165, %v214
  %v220 = vmul.f32 %v169, %v214
  %v221 = vmul.f32 %v173, %v214
  %v222 = vmul.f32 %v177, %v214
  %v223 = vmul.f32 %v181, %v214
  %v224 = vmul.f32 %v185, %v214
  %v225 = vmul.f32 %v189, %v214
  %v226 = vmul.f32 %v193, %v214
  %v227 = vmul.f32 %v197, %v214
  %v228 = vmul.f32 %v201, %v214
  %v229 = vmul.f32 %v205, %v214
  %v230 = vmul.f32 %v209, %v214
  %v231 = vadd.f32 %v131, %v215
  %v232 = vadd.f32 %v132, %v216
  %v233 = vadd.f32 %v133, %v217
  %v234 = vadd.f32 %v134, %v218
  %v235 = vadd.f32 %v135, %v219
  %v236 = vadd.f32 %v136, %v220
  %v237 = vadd.f32 %v137, %v221
  %v238 = vadd.f32 %v138, %v222
  %v239 = vadd.f32 %v139, %v223
  %v240 = vadd.f32 %v140, %v224
  %v241 = vadd.f32 %v141, %v225
  %v242 = vadd.f32 %v142, %v226
  %v243 = vadd.f32 %v143, %v227
  %v244 = vadd.f32 %v144, %v228
  %v245 = vadd.f32 %v145, %v229
  %v246 = vadd.f32 %v146, %v230
  %247 = vset.pattern.permute.xlu0 2
  %248 = vperm.xlu0 %247, %v30
  %v249 = vpop.permute.xlu0 %248
  %251 = vset.pattern.permute.xlu0 2
  %252 = vperm.xlu0 %251, %v31
  %v253 = vpop.permute.xlu0 %252
  %255 = vset.pattern.permute.xlu0 2
  %256 = vperm.xlu0 %255, %v32
  %v257 = vpop.permute.xlu0 %256
  %259 = vset.pattern.permute.xlu0 2
  %260 = vperm.xlu0 %259, %v33
  %v261 = vpop.permute.xlu0 %260
  %263 = vset.pattern.permute.xlu0 2
  %264 = vperm.xlu0 %263, %v34
  %v265 = vpop.permute.xlu0 %264
  %267 = vset.pattern.permute.xlu0 2
  %268 = vperm.xlu0 %267, %v35
  %v269 = vpop.permute.xlu0 %268
  %271 = vset.pattern.permute.xlu0 2
  %272 = vperm.xlu0 %271, %v36
  %v273 = vpop.permute.xlu0 %272
  %275 = vset.pattern.permute.xlu0 2
  %276 = vperm.xlu0 %275, %v37
  %v277 = vpop.permute.xlu0 %276
  %279 = vset.pattern.permute.xlu0 2
  %280 = vperm.xlu0 %279, %v38
  %v281 = vpop.permute.xlu0 %280
  %283 = vset.pattern.permute.xlu0 2
  %284 = vperm.xlu0 %283, %v39
  %v285 = vpop.permute.xlu0 %284
  %287 = vset.pattern.permute.xlu0 2
  %288 = vperm.xlu0 %287, %v40
  %v289 = vpop.permute.xlu0 %288
  %291 = vset.pattern.permute.xlu0 2
  %292 = vperm.xlu0 %291, %v41
  %v293 = vpop.permute.xlu0 %292
  %295 = vset.pattern.permute.xlu0 2
  %296 = vperm.xlu0 %295, %v42
  %v297 = vpop.permute.xlu0 %296
  %299 = vset.pattern.permute.xlu0 2
  %300 = vperm.xlu0 %299, %v43
  %v301 = vpop.permute.xlu0 %300
  %303 = vset.pattern.permute.xlu0 2
  %304 = vperm.xlu0 %303, %v44
  %v305 = vpop.permute.xlu0 %304
  %307 = vset.pattern.permute.xlu0 2
  %308 = vperm.xlu0 %307, %v45
  %v309 = vpop.permute.xlu0 %308
  %v311 = vlaneseq
  %v312 = vshrl.u32 %v311, 7
  %v313 = vsub.s32 2, %v312
  %v314 = vrot.slane %v46, %v313
  %v315 = vmul.f32 %v249, %v314
  %v316 = vmul.f32 %v253, %v314
  %v317 = vmul.f32 %v257, %v314
  %v318 = vmul.f32 %v261, %v314
  %v319 = vmul.f32 %v265, %v314
  %v320 = vmul.f32 %v269, %v314
  %v321 = vmul.f32 %v273, %v314
  %v322 = vmul.f32 %v277, %v314
  %v323 = vmul.f32 %v281, %v314
  %v324 = vmul.f32 %v285, %v314
  %v325 = vmul.f32 %v289, %v314
  %v326 = vmul.f32 %v293, %v314
  %v327 = vmul.f32 %v297, %v314
  %v328 = vmul.f32 %v301, %v314
  %v329 = vmul.f32 %v305, %v314
  %v330 = vmul.f32 %v309, %v314
  %v331 = vadd.f32 %v231, %v315
  %v332 = vadd.f32 %v232, %v316
  %v333 = vadd.f32 %v233, %v317
  %v334 = vadd.f32 %v234, %v318
  %v335 = vadd.f32 %v235, %v319
  %v336 = vadd.f32 %v236, %v320
  %v337 = vadd.f32 %v237, %v321
  %v338 = vadd.f32 %v238, %v322
  %v339 = vadd.f32 %v239, %v323
  %v340 = vadd.f32 %v240, %v324
  %v341 = vadd.f32 %v241, %v325
  %v342 = vadd.f32 %v242, %v326
  %v343 = vadd.f32 %v243, %v327
  %v344 = vadd.f32 %v244, %v328
  %v345 = vadd.f32 %v245, %v329
  %v346 = vadd.f32 %v246, %v330
  %347 = vset.pattern.permute.xlu0 3
  %348 = vperm.xlu0 %347, %v30
  %v349 = vpop.permute.xlu0 %348
  %351 = vset.pattern.permute.xlu0 3
  %352 = vperm.xlu0 %351, %v31
  %v353 = vpop.permute.xlu0 %352
  %355 = vset.pattern.permute.xlu0 3
  %356 = vperm.xlu0 %355, %v32
  %v357 = vpop.permute.xlu0 %356
  %359 = vset.pattern.permute.xlu0 3
  %360 = vperm.xlu0 %359, %v33
  %v361 = vpop.permute.xlu0 %360
  %363 = vset.pattern.permute.xlu0 3
  %364 = vperm.xlu0 %363, %v34
  %v365 = vpop.permute.xlu0 %364
  %367 = vset.pattern.permute.xlu0 3
  %368 = vperm.xlu0 %367, %v35
  %v369 = vpop.permute.xlu0 %368
  %371 = vset.pattern.permute.xlu0 3
  %372 = vperm.xlu0 %371, %v36
  %v373 = vpop.permute.xlu0 %372
  %375 = vset.pattern.permute.xlu0 3
  %376 = vperm.xlu0 %375, %v37
  %v377 = vpop.permute.xlu0 %376
  %379 = vset.pattern.permute.xlu0 3
  %380 = vperm.xlu0 %379, %v38
  %v381 = vpop.permute.xlu0 %380
  %383 = vset.pattern.permute.xlu0 3
  %384 = vperm.xlu0 %383, %v39
  %v385 = vpop.permute.xlu0 %384
  %387 = vset.pattern.permute.xlu0 3
  %388 = vperm.xlu0 %387, %v40
  %v389 = vpop.permute.xlu0 %388
  %391 = vset.pattern.permute.xlu0 3
  %392 = vperm.xlu0 %391, %v41
  %v393 = vpop.permute.xlu0 %392
  %395 = vset.pattern.permute.xlu0 3
  %396 = vperm.xlu0 %395, %v42
  %v397 = vpop.permute.xlu0 %396
  %399 = vset.pattern.permute.xlu0 3
  %400 = vperm.xlu0 %399, %v43
  %v401 = vpop.permute.xlu0 %400
  %403 = vset.pattern.permute.xlu0 3
  %404 = vperm.xlu0 %403, %v44
  %v405 = vpop.permute.xlu0 %404
  %407 = vset.pattern.permute.xlu0 3
  %408 = vperm.xlu0 %407, %v45
  %v409 = vpop.permute.xlu0 %408
  %v411 = vlaneseq
  %v412 = vshrl.u32 %v411, 7
  %v413 = vsub.s32 3, %v412
  %v414 = vrot.slane %v46, %v413
  %v415 = vmul.f32 %v349, %v414
  %v416 = vmul.f32 %v353, %v414
  %v417 = vmul.f32 %v357, %v414
  %v418 = vmul.f32 %v361, %v414
  %v419 = vmul.f32 %v365, %v414
  %v420 = vmul.f32 %v369, %v414
  %v421 = vmul.f32 %v373, %v414
  %v422 = vmul.f32 %v377, %v414
  %v423 = vmul.f32 %v381, %v414
  %v424 = vmul.f32 %v385, %v414
  %v425 = vmul.f32 %v389, %v414
  %v426 = vmul.f32 %v393, %v414
  %v427 = vmul.f32 %v397, %v414
  %v428 = vmul.f32 %v401, %v414
  %v429 = vmul.f32 %v405, %v414
  %v430 = vmul.f32 %v409, %v414
  %v431 = vadd.f32 %v331, %v415
  %v432 = vadd.f32 %v332, %v416
  %v433 = vadd.f32 %v333, %v417
  %v434 = vadd.f32 %v334, %v418
  %v435 = vadd.f32 %v335, %v419
  %v436 = vadd.f32 %v336, %v420
  %v437 = vadd.f32 %v337, %v421
  %v438 = vadd.f32 %v338, %v422
  %v439 = vadd.f32 %v339, %v423
  %v440 = vadd.f32 %v340, %v424
  %v441 = vadd.f32 %v341, %v425
  %v442 = vadd.f32 %v342, %v426
  %v443 = vadd.f32 %v343, %v427
  %v444 = vadd.f32 %v344, %v428
  %v445 = vadd.f32 %v345, %v429
  %v446 = vadd.f32 %v346, %v430
  %v447 = vld [vmem:[%s2] sm:$0x1]
  %v449 = vlaneseq
  %v450 = vshrl.u32 %v449, 7
  %v451 = vsub.s32 0, %v450
  %v452 = vrot.slane %v447, %v451
  %v454 = vadd.f32 %v431, %v452
  %v455 = vadd.f32 %v432, %v452
  %v456 = vadd.f32 %v433, %v452
  %v457 = vadd.f32 %v434, %v452
  %v458 = vadd.f32 %v435, %v452
  %v459 = vadd.f32 %v436, %v452
  %v460 = vadd.f32 %v437, %v452
  %v461 = vadd.f32 %v438, %v452
  %v462 = vadd.f32 %v439, %v452
  %v463 = vadd.f32 %v440, %v452
  %v464 = vadd.f32 %v441, %v452
  %v465 = vadd.f32 %v442, %v452
  %v466 = vadd.f32 %v443, %v452
  %v467 = vadd.f32 %v444, %v452
  %v468 = vadd.f32 %v445, %v452
  %v469 = vadd.f32 %v446, %v452
  %v470 = vmax.f32 %v454, 0.0
  %v471 = vmax.f32 %v455, 0.0
  %v472 = vmax.f32 %v456, 0.0
  %v473 = vmax.f32 %v457, 0.0
  %v474 = vmax.f32 %v458, 0.0
  %v475 = vmax.f32 %v459, 0.0
  %v476 = vmax.f32 %v460, 0.0
  %v477 = vmax.f32 %v461, 0.0
  %v478 = vmax.f32 %v462, 0.0
  %v479 = vmax.f32 %v463, 0.0
  %v480 = vmax.f32 %v464, 0.0
  %v481 = vmax.f32 %v465, 0.0
  %v482 = vmax.f32 %v466, 0.0
  %v483 = vmax.f32 %v467, 0.0
  %v484 = vmax.f32 %v468, 0.0
  %v485 = vmax.f32 %v469, 0.0
  %vm486 = vcmask 64512
  %487 = vst.msk [vmem:[%s3] sm:$0xff] %vm486, %v470
  %488 = vst.msk [vmem:[%s3 + $0x8] sm:$0xff] %vm486, %v471
  %489 = vst.msk [vmem:[%s3 + $0x10] sm:$0xff] %vm486, %v472
  %490 = vst.msk [vmem:[%s3 + $0x18] sm:$0xff] %vm486, %v473
  %491 = vst.msk [vmem:[%s3 + $0x20] sm:$0xff] %vm486, %v474
  %492 = vst.msk [vmem:[%s3 + $0x28] sm:$0xff] %vm486, %v475
  %493 = vst.msk [vmem:[%s3 + $0x30] sm:$0xff] %vm486, %v476
  %494 = vst.msk [vmem:[%s3 + $0x38] sm:$0xff] %vm486, %v477
  %495 = vst.msk [vmem:[%s3 + $0x40] sm:$0xff] %vm486, %v478
  %496 = vst.msk [vmem:[%s3 + $0x48] sm:$0xff] %vm486, %v479
  %497 = vst.msk [vmem:[%s3 + $0x50] sm:$0xff] %vm486, %v480
  %498 = vst.msk [vmem:[%s3 + $0x58] sm:$0xff] %vm486, %v481
  %499 = vst.msk [vmem:[%s3 + $0x60] sm:$0xff] %vm486, %v482
  %500 = vst.msk [vmem:[%s3 + $0x68] sm:$0xff] %vm486, %v483
  %501 = vst.msk [vmem:[%s3 + $0x70] sm:$0xff] %vm486, %v484
  %502 = vst.msk [vmem:[%s3 + $0x78] sm:$0xff] %vm486, %v485
  // Predicated region
  $region14: #{up_pool.1} parent=0 // pred_check
    _
  $region15: #{up_pool.1} parent=0 // pred_check_branch
    %504 = sbr.rel (0) target = $region17
  $region16: #{up_pool.1} parent=0 // pred_region
    _
  $region17: #{up_pool.1} parent=0 // pred_fallthru
    _
  // Predicated region
  $region18: #{up_pool.1} parent=0 // pred_check
    _
  $region19: #{up_pool.1} parent=0 // pred_check_branch
    %506 = sbr.rel (0) target = $region21
  $region20: #{up_pool.1} parent=0 // pred_region
    _
  $region21: #{up_pool.1} parent=0 // pred_fallthru
    _

</llo_original>
